<compile_context>
chip_gen: v7x
topology: tpu7x:2x2x1
jax: 0.10.0
libtpu: 0.0.40
codegen_flags: <defaults>
</compile_context>

<pallas_src>
import functools
import math

import jax
import jax.numpy as jnp
from jax.experimental import pallas as pl
from jax.experimental.pallas import tpu as pltpu


_LN_EPS = 1e-5                       # torch nn.LayerNorm default eps
_SQRT_2_OVER_PI = 0.7978845608028654


def _gelu_tanh(x):
    # TODO(synk): torch nn.GELU() defaults to the exact erf form; the tanh approximation (~1e-3
    # deviation) is used for lowering safety.  The in-script reference uses the same form.
    return 0.5 * x * (1.0 + jnp.tanh(_SQRT_2_OVER_PI * (x + 0.044715 * x * x * x)))


def _round_up(n, m):
    return ((n + m - 1) // m) * m


def _balanced_block(total, tile, align):
    """Split `total` into equal-ish blocks of size <= ~tile, aligned to `align`.

    Returns (block, padded_total) with padded_total = n_blocks * block >= total."""
    tiles = max(1, pl.cdiv(total, tile))
    block = _round_up(pl.cdiv(total, tiles), align)
    return block, tiles * block


def _divisor_block(total, tile, align):
    """Largest multiple of `align` that divides `total` and is <= tile (falls back to `total`)."""
    if total % align == 0:
        best = align
        d = align
        lim = min(tile, total)
        while d <= lim:
            if total % d == 0:
                best = d
            d += align
        return best
    return total


def _vmem_limit(need_bytes):
    """Generation-aware scoped-VMEM limit (≈112 MiB on v5e/v6e, ≈48 MiB on v7x)."""
    cap = 64 << 20
    try:
        info = pltpu.get_tpu_info()
        cap = int(getattr(info, "vmem_capacity_bytes", cap))
    except Exception:
        pass
    ceiling = max(cap - (16 << 20), 32 << 20)
    return int(min(max(int(need_bytes) + (4 << 20), 32 << 20), ceiling))


# ----------------------------------------------------------------------------------------------------
# Kernels
# ----------------------------------------------------------------------------------------------------

def _ks_linear_kernel(x_ref, w_ref, b_ref, o_ref, acc_ref, *, activation, mxu_dtype):
    """K-streamed Linear (+ optional ReLU): adapter down_proj and head_image."""
    k = pl.program_id(1)

    @pl.when(k == 0)
    def _():
        acc_ref[...] = jnp.zeros_like(acc_ref)

    acc_ref[...] += jnp.dot(x_ref[...].astype(mxu_dtype), w_ref[...].astype(mxu_dtype),
                            preferred_element_type=jnp.float32)

    @pl.when(k == pl.num_programs(1) - 1)
    def _():
        y = acc_ref[...] + b_ref[...].astype(jnp.float32)
        if activation == "relu":
            y = jnp.maximum(y, 0.0)
        o_ref[...] = y.astype(o_ref.dtype)


def _ks_ffn_kernel(x_ref, w_ref, b_ref, g_ref, beta_ref, o_ref, acc_ref, *, eps, mxu_dtype):
    """K-streamed Linear -> LayerNorm -> GELU (embedder tail). Dropout is an inference identity."""
    k = pl.program_id(1)

    @pl.when(k == 0)
    def _():
        acc_ref[...] = jnp.zeros_like(acc_ref)

    acc_ref[...] += jnp.dot(x_ref[...].astype(mxu_dtype), w_ref[...].astype(mxu_dtype),
                            preferred_element_type=jnp.float32)

    @pl.when(k == pl.num_programs(1) - 1)
    def _():
        y = acc_ref[...] + b_ref[...].astype(jnp.float32)
        mu = jnp.mean(y, axis=-1, keepdims=True)
        var = jnp.mean(jnp.square(y - mu), axis=-1, keepdims=True)
        y = (y - mu) * jax.lax.rsqrt(var + eps)
        y = y * g_ref[...].astype(jnp.float32) + beta_ref[...].astype(jnp.float32)
        o_ref[...] = _gelu_tanh(y).astype(o_ref.dtype)


def _adapter_up_kernel(d_ref, wu_ref, bu_ref, xr_ref, o_ref, *, scale, mxu_dtype):
    """N-tiled adapter up_proj (K = bottleneck is small): up = d @ Wu + bu (* scale) + residual."""
    up = jnp.dot(d_ref[...].astype(mxu_dtype), wu_ref[...].astype(mxu_dtype),
                 preferred_element_type=jnp.float32)
    up = up + bu_ref[...].astype(jnp.float32)
    if scale != 1.0:                      # static: skipped when adapter_scalar == '1.0'
        up = up * scale
    o_ref[...] = (up + xr_ref[...].astype(jnp.float32)).astype(o_ref.dtype)


def _resmlp_kernel(x_ref, w_ref, b_ref, g_ref, beta_ref, o_ref, act_ref, acc_ref,
                   *, eps, mxu_dtype, block_k):
    """All ResMLP blocks in one call.  grid = (row_tile, block_idx, k_tile).

    The running activation (which is also the residual) lives in the f32 VMEM scratch `act_ref`
    across block/k steps; block weights stream in (block_k, h) slabs from the stacked (nb, h, h)
    tensor.  Only the final activation is written back to HBM."""
    b = pl.program_id(1)
    k = pl.program_id(2)
    nb = pl.num_programs(1)
    nk = pl.num_programs(2)

    @pl.when(jnp.logical_and(b == 0, k == 0))
    def _():
        act_ref[...] = x_ref[...].astype(jnp.float32)

    @pl.when(k == 0)
    def _():
        acc_ref[...] = jnp.zeros_like(acc_ref)

    koff = pl.multiple_of(k * block_k, block_k)
    xk = act_ref[:, pl.ds(koff, block_k)]
    acc_ref[...] += jnp.dot(xk.astype(mxu_dtype), w_ref[0].astype(mxu_dtype),
                            preferred_element_type=jnp.float32)

    @pl.when(k == nk - 1)
    def _():
        y = acc_ref[...] + b_ref[0].astype(jnp.float32)
        mu = jnp.mean(y, axis=-1, keepdims=True)
        var = jnp.mean(jnp.square(y - mu), axis=-1, keepdims=True)
        y = (y - mu) * jax.lax.rsqrt(var + eps)
        y = y * g_ref[0].astype(jnp.float32) + beta_ref[0].astype(jnp.float32)
        y = _gelu_tanh(y) + act_ref[...]        # residual add (post-GELU, as in ResMLP.forward)
        act_ref[...] = y

        @pl.when(b == nb - 1)
        def _():
            o_ref[...] = y.astype(o_ref.dtype)


# ----------------------------------------------------------------------------------------------------
# Launchers
# ----------------------------------------------------------------------------------------------------

def _ks_call(kernel_fn, x, w, consts, out_dim, out_dtype, *, block_m, tile_k):
    """K-streamed fused-linear launcher.  x:(M, K) with M already a multiple of block_m."""
    M, K = x.shape
    assert M % block_m == 0
    block_k, k_pad = _balanced_block(K, tile_k, 128)
    if k_pad != K:
        # TODO(synk): at production sizes (in_dim=15724) pre-pad the weight once outside the forward
        # instead of per call; zero rows/cols contribute nothing to the matmul.
        x = jnp.pad(x, ((0, 0), (0, k_pad - K)))
        w = jnp.pad(w, ((0, k_pad - K), (0, 0)))
    grid = (M // block_m, k_pad // block_k)

    in_specs = [
        pl.BlockSpec((block_m, block_k), lambda i, k: (i, k)),
        pl.BlockSpec((block_k, out_dim), lambda i, k: (k, 0)),
    ]
    in_specs += [pl.BlockSpec(c.shape, lambda i, k: (0, 0)) for c in consts]

    need = (2 * block_m * block_k * x.dtype.itemsize
            + 2 * block_k * out_dim * w.dtype.itemsize
            + 2 * sum(int(c.size) * c.dtype.itemsize for c in consts)
            + 2 * block_m * out_dim * jnp.dtype(out_dtype).itemsize
            + block_m * out_dim * 4)

    return pl.pallas_call(
        kernel_fn,
        out_shape=jax.ShapeDtypeStruct((M, out_dim), out_dtype),
        grid_spec=pltpu.PrefetchScalarGridSpec(
            num_scalar_prefetch=0,
            grid=grid,
            in_specs=in_specs,
            out_specs=pl.BlockSpec((block_m, out_dim), lambda i, k: (i, 0)),
            scratch_shapes=[pltpu.VMEM((block_m, out_dim), jnp.float32)],
        ),
        compiler_params=pltpu.CompilerParams(
            dimension_semantics=("parallel", "arbitrary"),
            vmem_limit_bytes=_vmem_limit(need),
        ),
    )(x, w, *consts)


def _adapter_up_call(down, wu, bu, x_res, out_dtype, *, block_m, tile_n, scale, mxu_dtype):
    """N-tiled up-proj + residual.  K = bottleneck (128) needs no streaming."""
    M, bneck = down.shape
    N = wu.shape[1]
    assert M % block_m == 0
    block_n, n_pad = _balanced_block(N, tile_n, 128)
    if n_pad != N:
        wu = jnp.pad(wu, ((0, 0), (0, n_pad - N)))
        bu = jnp.pad(bu, ((0, 0), (0, n_pad - N)))
        x_res = jnp.pad(x_res, ((0, 0), (0, n_pad - N)))
    grid = (M // block_m, n_pad // block_n)

    kernel = functools.partial(_adapter_up_kernel, scale=float(scale), mxu_dtype=mxu_dtype)
    need = (2 * block_m * bneck * down.dtype.itemsize
            + 2 * bneck * block_n * wu.dtype.itemsize
            + 2 * block_n * bu.dtype.itemsize
            + 2 * block_m * block_n * x_res.dtype.itemsize
            + 2 * block_m * block_n * jnp.dtype(out_dtype).itemsize)

    out = pl.pallas_call(
        kernel,
        out_shape=jax.ShapeDtypeStruct((M, n_pad), out_dtype),
        grid_spec=pltpu.PrefetchScalarGridSpec(
            num_scalar_prefetch=0,
            grid=grid,
            in_specs=[
                pl.BlockSpec((block_m, bneck), lambda i, j: (i, 0)),
                pl.BlockSpec((bneck, block_n), lambda i, j: (0, j)),
                pl.BlockSpec((1, block_n), lambda i, j: (0, j)),
                pl.BlockSpec((block_m, block_n), lambda i, j: (i, j)),
            ],
            out_specs=pl.BlockSpec((block_m, block_n), lambda i, j: (i, j)),
        ),
        compiler_params=pltpu.CompilerParams(
            dimension_semantics=("parallel", "parallel"),
            vmem_limit_bytes=_vmem_limit(need),
        ),
    )(down, wu, bu, x_res)
    return out if n_pad == N else out[:, :N]


def _resmlp_call(x, ws, bs, gs, betas, *, block_m, tile_k, mxu_dtype):
    """All ResMLP blocks fused into one pallas_call (activation resident in VMEM)."""
    M, h = x.shape
    nb = ws.shape[0]
    assert M % block_m == 0
    block_k = _divisor_block(h, tile_k, 128)
    grid = (M // block_m, nb, h // block_k)

    kernel = functools.partial(_resmlp_kernel, eps=_LN_EPS, mxu_dtype=mxu_dtype, block_k=block_k)
    need = (2 * block_m * h * x.dtype.itemsize            # x in
            + 2 * block_k * h * ws.dtype.itemsize         # weight stream
            + 2 * 3 * h * bs.dtype.itemsize                # b / gamma / beta
            + 2 * block_m * h * x.dtype.itemsize           # out
            + 2 * block_m * h * 4)                         # act + acc scratch

    return pl.pallas_call(
        kernel,
        out_shape=jax.ShapeDtypeStruct((M, h), x.dtype),
        grid_spec=pltpu.PrefetchScalarGridSpec(
            num_scalar_prefetch=0,
            grid=grid,
            in_specs=[
                pl.BlockSpec((block_m, h), lambda i, b, k: (i, 0)),
                pl.BlockSpec((1, block_k, h), lambda i, b, k: (b, k, 0)),
                pl.BlockSpec((1, 1, h), lambda i, b, k: (b, 0, 0)),
                pl.BlockSpec((1, 1, h), lambda i, b, k: (b, 0, 0)),
                pl.BlockSpec((1, 1, h), lambda i, b, k: (b, 0, 0)),
            ],
            out_specs=pl.BlockSpec((block_m, h), lambda i, b, k: (i, 0)),
            scratch_shapes=[pltpu.VMEM((block_m, h), jnp.float32),
                            pltpu.VMEM((block_m, h), jnp.float32)],
        ),
        compiler_params=pltpu.CompilerParams(
            dimension_semantics=("parallel", "arbitrary", "arbitrary"),
            vmem_limit_bytes=_vmem_limit(need),
        ),
    )(x, ws, bs, gs, betas)


# ----------------------------------------------------------------------------------------------------
# Parameter preparation + forward
# ----------------------------------------------------------------------------------------------------

def prepare_params(params, *, weight_dtype=jnp.float32):
    """One-time weight preparation: cast to the HBM streaming dtype and stack ResMLP block params.
    Done OUTSIDE the forward so no per-call tree_map cast traffic."""
    cast = lambda a: jnp.asarray(a, weight_dtype)
    return {
        "adapter": {k: cast(v) for k, v in params["adapter"].items()},
        "embed": {k: cast(v) for k, v in params["embed"].items()},
        "blocks_w": jnp.stack([cast(b["w"]) for b in params["blocks"]]),       # (nb, h, h)
        "blocks_b": jnp.stack([cast(b["b"]) for b in params["blocks"]]),       # (nb, 1, h)
        "blocks_g": jnp.stack([cast(b["g"]) for b in params["blocks"]]),
        "blocks_beta": jnp.stack([cast(b["beta"]) for b in params["blocks"]]),
        "head": {k: cast(v) for k, v in params["head"].items()},
    }


def mind_single_image_git_forward(x, prepared, *, tile_m=256, tile_k=512, tile_n=2048,
                                  mxu_dtype=jnp.bfloat16, adapter_scale=1.0):
    """MindSingle_image_GIT forward (single subject) from the fused Pallas kernels above."""
    # TODO(synk): nn.Dropout(0.5)/(0.15) are inference-mode identities (no in-kernel dropout RNG).
    # TODO(synk): adapter_layernorm_option ('in'/'out') and the learnable adapter scalar are unused
    # under MindSingle_image_GIT's default config and are not implemented.
    lead = x.shape[:-1]
    x2 = x.reshape(-1, x.shape[-1])
    act_dtype = prepared["embed"]["w"].dtype        # stream activations in the weight dtype
    x2 = x2.astype(act_dtype)

    M = x2.shape[0]
    block_m, m_pad = _balanced_block(M, tile_m, 8)  # balanced row tiling, rows multiple of 8
    if m_pad != M:
        x2 = jnp.pad(x2, ((0, m_pad - M), (0, 0)))  # pad once; sliced off at the very end

    # --- embedder: Adapter_Layer (down -> ReLU -> up -> +residual) ---
    a = prepared["adapter"]
    down = _ks_call(functools.partial(_ks_linear_kernel, activation="relu", mxu_dtype=mxu_dtype),
                    x2, a["wd"], (a["bd"],), a["wd"].shape[1], act_dtype,
                    block_m=block_m, tile_k=tile_k)
    x2 = _adapter_up_call(down, a["wu"], a["bu"], x2, act_dtype,
                          block_m=block_m, tile_n=tile_n, scale=adapter_scale, mxu_dtype=mxu_dtype)

    # --- embedder tail: Linear -> LayerNorm -> GELU ---
    e = prepared["embed"]
    x2 = _ks_call(functools.partial(_ks_ffn_kernel, eps=_LN_EPS, mxu_dtype=mxu_dtype),
                  x2, e["w"], (e["b"], e["g"], e["beta"]), e["w"].shape[1], act_dtype,
                  block_m=block_m, tile_k=tile_k)

    # --- translator: ResMLP, all blocks in one pipelined pallas_call ---
    x2 = _resmlp_call(x2, prepared["blocks_w"], prepared["blocks_b"],
                      prepared["blocks_g"], prepared["blocks_beta"],
                      block_m=block_m, tile_k=tile_k, mxu_dtype=mxu_dtype)

    # --- head_image ---
    hd = prepared["head"]
    x2 = _ks_call(functools.partial(_ks_linear_kernel, activation=None, mxu_dtype=mxu_dtype),
                  x2, hd["w"], (hd["b"],), hd["w"].shape[1], act_dtype,
                  block_m=block_m, tile_k=tile_k)

    if m_pad != M:
        x2 = x2[:M]
    return x2.reshape(*lead, x2.shape[-1])


# ----------------------------------------------------------------------------------------------------
# Deterministic synthetic parameters + pure-JAX reference
# ----------------------------------------------------------------------------------------------------

def init_params(key, in_dim, h, out_dim, n_blocks, bottleneck=128):
    keys = iter(jax.random.split(key, 7 + 2 * n_blocks))

    def linear_init(fan_in, fan_out):
        bound = 1.0 / math.sqrt(fan_in)              # torch nn.Linear default init bounds
        w = jax.random.uniform(next(keys), (fan_in, fan_out), jnp.float32, -bound, bound)
        b = jax.random.uniform(next(keys), (1, fan_out), jnp.float32, -bound, bound)
        return w, b

    # Adapter: lora init would zero up_proj (exact no-op); use small random values so the hot path
    # is exercised non-trivially with synthetic weights.
    bound_d = 1.0 / math.sqrt(in_dim)
    wd = jax.random.uniform(next(keys), (in_dim, bottleneck), jnp.float32, -bound_d, bound_d)
    bd = jnp.zeros((1, bottleneck), jnp.float32)
    wu = 0.02 * jax.random.normal(next(keys), (bottleneck, in_dim), jnp.float32)
    bu = 0.01 * jax.random.normal(next(keys), (1, in_dim), jnp.float32)
    adapter = dict(wd=wd, bd=bd, wu=wu, bu=bu)

    we, be = linear_init(in_dim, h)
    embed = dict(w=we, b=be, g=jnp.ones((1, h), jnp.float32), beta=jnp.zeros((1, h), jnp.float32))

    blocks = []
    for _ in range(n_blocks):
        w, b = linear_init(h, h)
        blocks.append(dict(w=w, b=b, g=jnp.ones((1, h), jnp.float32), beta=jnp.zeros((1, h), jnp.float32)))

    wh, bh = linear_init(h, out_dim)
    head = dict(w=wh, b=bh)
    return dict(adapter=adapter, embed=embed, blocks=blocks, head=head)


def reference_forward(x, params):
    def ln(y, g, beta):
        mu = jnp.mean(y, axis=-1, keepdims=True)
        var = jnp.mean(jnp.square(y - mu), axis=-1, keepdims=True)
        return (y - mu) * jax.lax.rsqrt(var + _LN_EPS) * g + beta

    a = params["adapter"]
    down = jnp.maximum(x @ a["wd"] + a["bd"], 0.0)
    x = (down @ a["wu"] + a["bu"]) + x                                   # scale=1.0, add_residual
    e = params["embed"]
    x = _gelu_tanh(ln(x @ e["w"] + e["b"], e["g"], e["beta"]))
    for blk in params["blocks"]:
        x = _gelu_tanh(ln(x @ blk["w"] + blk["b"], blk["g"], blk["beta"])) + x
    hd = params["head"]
    return x @ hd["w"] + hd["b"]


def _rel_err(a, b):
    a = a.astype(jnp.float32)
    b = b.astype(jnp.float32)
    return float(jnp.linalg.norm(a - b) / (jnp.linalg.norm(b) + 1e-12))


# ----------------------------------------------------------------------------------------------------
# Demo
# ----------------------------------------------------------------------------------------------------

if __name__ == "__main__":
    # Small shapes consistent with MindSingle_image_GIT(in_dim=15724, h=4096, out_dim=768, n_blocks=4,
    # adapter bottleneck=128), scaled down.  tile_k=128 < K so the K-streaming accumulator path and
    # batch=4 < block_m so the M-padding path are both exercised.
    batch, in_dim, h, out_dim, n_blocks, bottleneck = 4, 512, 256, 128, 4, 128

    key = jax.random.PRNGKey(0)
    kx, kp = jax.random.split(key)
    x = jax.random.normal(kx, (batch, in_dim), jnp.float32)
    params = init_params(kp, in_dim, h, out_dim, n_blocks, bottleneck=bottleneck)
    ref = reference_forward(x, params)

    tiles = dict(tile_m=256, tile_k=128, tile_n=256)

    # 1) f32 weight streaming, f32 MXU operands: validates the kernel pipeline numerics.
    prep_f32 = prepare_params(params, weight_dtype=jnp.float32)
    out_f32 = mind_single_image_git_forward(x, prep_f32, mxu_dtype=jnp.float32, **tiles)
    out_f32 = jax.block_until_ready(out_f32)
    assert out_f32.shape == (batch, out_dim)
    assert _rel_err(out_f32, ref) < 2e-2, "f32 path mismatch vs JAX reference"

    # 2) default fast path: f32 weights in HBM, bf16 MXU operands (f32 accumulation).
    out_fast = mind_single_image_git_forward(x, prep_f32, **tiles)
    out_fast = jax.block_until_ready(out_fast)
    assert _rel_err(out_fast, ref) < 4e-2, "bf16-MXU path diverged from reference"

    # 3) bf16 weight streaming (one-time pre-cast; halves the dominant weight HBM traffic).
    prep_bf16 = prepare_params(params, weight_dtype=jnp.bfloat16)
    out_bf16 = mind_single_image_git_forward(x, prep_bf16, **tiles)
    out_bf16 = jax.block_until_ready(out_bf16)
    assert _rel_err(out_bf16, ref) < 8e-2, "bf16 weight-streaming path diverged from reference"

    print("KERNEL_OK")
</pallas_src>

<mosaic_0001>
module attributes {stable_mosaic.version = 11 : i64} {
  func.func @_ks_linear_kernel(%arg0: i32, %arg1: i32, %arg2: memref<8x128xf32, #tpu.memory_space<vmem>>, %arg3: memref<128x128xf32, #tpu.memory_space<vmem>>, %arg4: memref<1x128xf32, #tpu.memory_space<vmem>>, %arg5: memref<8x128xf32, #tpu.memory_space<vmem>>, %arg6: memref<8x128xf32, #tpu.memory_space<vmem>>) attributes {dimension_semantics = [#tpu.dimension_semantics<parallel>, #tpu.dimension_semantics<arbitrary>], iteration_bounds = array<i64: 1, 4>, scalar_prefetch = 0 : i64, scratch_operands = 1 : i64, tpu.core_type = #tpu.core_type<tc>, window_params = [{transform_indices = @transform_0, window_bounds = array<i64: 8, 128>}, {transform_indices = @transform_1, window_bounds = array<i64: 128, 128>}, {pipeline_mode = #tpu.pipeline_mode<synchronous>, transform_indices = @transform_2, window_bounds = array<i64: 1, 128>}, {transform_indices = @transform_3, window_bounds = array<i64: 8, 128>}]} {
    %c0_i32 = arith.constant 0 : i32
    %0 = arith.cmpi eq, %arg1, %c0_i32 : i32
    %1 = arith.extui %0 : i1 to i32
    %c0_i32_0 = arith.constant 0 : i32
    %2 = arith.cmpi ne, %1, %c0_i32_0 : i32
    scf.if %2 {
      %cst_9 = arith.constant 0.000000e+00 : f32
      %12 = vector.broadcast %cst_9 : f32 to vector<8x128xf32>
      %c0_10 = arith.constant 0 : index
      %c0_11 = arith.constant 0 : index
      %13 = vector.load %arg6[%c0_10, %c0_11] : memref<8x128xf32, #tpu.memory_space<vmem>>, vector<8x128xf32>
      tpu.vector_store %arg6[%c0_10, %c0_11], %12 {strides = array<i32>} : memref<8x128xf32, #tpu.memory_space<vmem>>, vector<8x128xf32>,
    } else {
    }
    %c0 = arith.constant 0 : index
    %c0_1 = arith.constant 0 : index
    %3 = vector.load %arg6[%c0, %c0_1] : memref<8x128xf32, #tpu.memory_space<vmem>>, vector<8x128xf32>
    %c0_2 = arith.constant 0 : index
    %c0_3 = arith.constant 0 : index
    %4 = vector.load %arg2[%c0_2, %c0_3] : memref<8x128xf32, #tpu.memory_space<vmem>>, vector<8x128xf32>
    %c0_4 = arith.constant 0 : index
    %c0_5 = arith.constant 0 : index
    %5 = vector.load %arg3[%c0_4, %c0_5] : memref<128x128xf32, #tpu.memory_space<vmem>>, vector<128x128xf32>
    %cst = arith.constant dense<0.000000e+00> : vector<8x128xf32>
    %6 = tpu.matmul %4, %5, %cst {dimension_numbers = #tpu.dot_dimension_numbers<[1], [0], [0], [1], [0, 0, 1, 1], [], []>} : vector<8x128xf32>, vector<128x128xf32>, vector<8x128xf32> -> vector<8x128xf32>
    %7 = arith.addf %3, %6 : vector<8x128xf32>
    %c0_6 = arith.constant 0 : index
    %c0_7 = arith.constant 0 : index
    %8 = vector.load %arg6[%c0_6, %c0_7] : memref<8x128xf32, #tpu.memory_space<vmem>>, vector<8x128xf32>
    tpu.vector_store %arg6[%c0_6, %c0_7], %7 {strides = array<i32>} : memref<8x128xf32, #tpu.memory_space<vmem>>, vector<8x128xf32>,
    %c3_i32 = arith.constant 3 : i32
    %9 = arith.cmpi eq, %arg1, %c3_i32 : i32
    %10 = arith.extui %9 : i1 to i32
    %c0_i32_8 = arith.constant 0 : i32
    %11 = arith.cmpi ne, %10, %c0_i32_8 : i32
    scf.if %11 {
      %c0_9 = arith.constant 0 : index
      %c0_10 = arith.constant 0 : index
      %12 = vector.load %arg6[%c0_9, %c0_10] : memref<8x128xf32, #tpu.memory_space<vmem>>, vector<8x128xf32>
      %c0_11 = arith.constant 0 : index
      %c0_12 = arith.constant 0 : index
      %13 = vector.load %arg4[%c0_11, %c0_12] : memref<1x128xf32, #tpu.memory_space<vmem>>, vector<1x128xf32>
      %14 = vector.broadcast %13 : vector<1x128xf32> to vector<8x128xf32>
      %15 = arith.addf %12, %14 : vector<8x128xf32>
      %cst_13 = arith.constant 0.000000e+00 : f32
      %16 = vector.broadcast %cst_13 : f32 to vector<8x128xf32>
      %17 = arith.maximumf %15, %16 : vector<8x128xf32>
      %c0_14 = arith.constant 0 : index
      %c0_15 = arith.constant 0 : index
      %18 = vector.load %arg5[%c0_14, %c0_15] : memref<8x128xf32, #tpu.memory_space<vmem>>, vector<8x128xf32>
      tpu.vector_store %arg5[%c0_14, %c0_15], %17 {strides = array<i32>} : memref<8x128xf32, #tpu.memory_space<vmem>>, vector<8x128xf32>,
    } else {
    }
    return
  }
  func.func @transform_0(%arg0: i32, %arg1: i32) -> (i32, i32) {
    %c0_i32 = arith.constant 0 : i32
    return %arg0, %arg1 : i32, i32
  }
  func.func @transform_1(%arg0: i32, %arg1: i32) -> (i32, i32) {
    %c0_i32 = arith.constant 0 : i32
    %c0_i32_0 = arith.constant 0 : i32
    return %arg1, %c0_i32 : i32, i32
  }
  func.func @transform_2(%arg0: i32, %arg1: i32) -> (i32, i32) {
    %c0_i32 = arith.constant 0 : i32
    %c0_i32_0 = arith.constant 0 : i32
    %c0_i32_1 = arith.constant 0 : i32
    return %c0_i32, %c0_i32_0 : i32, i32
  }
  func.func @transform_3(%arg0: i32, %arg1: i32) -> (i32, i32) {
    %c0_i32 = arith.constant 0 : i32
    %c0_i32_0 = arith.constant 0 : i32
    return %arg0, %c0_i32 : i32, i32
  }
}

</mosaic_0001>

<llo_original>
// kernel: tpu_custom_call.1
$region0: #{tpu_custom_call.1}
  #allocation0 [shape = 'u32[]', space=smem, size = 0x4, offset = 0x4, fixed_abs, tag = 'smem constant byte address 0x4 - core index']
  #allocation1 [shape = 'u32[144,128]{1,0:T(1,128)}', space=vmem, size = 0x12000, scoped, tag = 'internal scratch']
  #allocation2 [shape = 'f32[8,128]{1,0:T(8,128)}', space=vmem, size = 0x1000, scoped, tag = 'scratch operand']
  %s0 = inlined_call_operand.hbm [shape: f32[8,512], index: 0, kind: input, shape index: {}]
  %s1 = inlined_call_operand.hbm [shape: f32[512,128], index: 1, kind: input, shape index: {}]
  %s2 = inlined_call_operand.vmem [shape: f32[1,128], index: 2, kind: input, shape index: {}]
  %s3 = inlined_call_operand.hbm [shape: f32[8,128], index: 3, kind: output, shape index: {}]
  %s4 = sld [smem:[#allocation0]]
  $region61: #{tpu_custom_call.1} parent=0
    _
  %s6 = ssub.s32 1, %s4
  %s7 = scalar_select 0, %s6, %s4
  $region1: #{tpu_custom_call.1} parent=0
    #allocation3 [shape = 'u8[8192]{0}', space=vmem, size = 0x2000, scoped, tag = 'input window, operand 0']
    #allocation4 [shape = 's32[2]{0}', space=sflag, size = 0x8, scoped, tag = 'scoped memory for tpu_custom_call.1']
    #allocation5 [shape = 's32[2]{0}', space=sflag, size = 0x8, scoped, tag = 'scoped memory for tpu_custom_call.1']
    #allocation6 [shape = 'u8[131072]{0}', space=vmem, size = 0x20000, scoped, tag = 'input window, operand 1']
    #allocation7 [shape = 's32[2]{0}', space=sflag, size = 0x8, scoped, tag = 'scoped memory for tpu_custom_call.1']
    #allocation8 [shape = 'u8[4096]{0}', space=vmem, size = 0x1000, scoped, tag = 'output window, operand 0, single buffered']
    %8 = vsyncpa [#allocation4], 0
    %s9 = scalar_lea.sflag [#allocation4], 1
    %10 = vsyncpa %s9, 0
    %11 = vsyncpa [#allocation7], 0
    %s12 = scalar_lea.sflag [#allocation7], 1
    %13 = vsyncpa %s12, 0
    %14 = vsyncpa [#allocation5], 0
    loop: start=0, step=1, limit=6
    $region2: #{tpu_custom_call.1} parent=1 // loop_pre_header
      _
    $region3: #{tpu_custom_call.1} parent=1 // loop_header
      %s16 = sphi 0, %s20
      %p17 = scmp.ge.s32.totalorder %s16, 6
      %s23 = sphi 0, %s35
      %s24 = sphi 0, %s31
      %s25 = sphi 0, %s23
      %s26 = sphi 0, %s24
      %s27 = sphi 0, %s25
      %s28 = sphi 0, %s26
      %s40 = sphi 0, %s42
      %s43 = sphi 0, %s40
      %s44 = sphi 0, %s43
      %s60 = sphi 0, %s44
      %s66 = sphi 0, %s68
      %s69 = sphi 0, %s66
      %s70 = sphi 0, %s69
      %s86 = sphi 0, %s70
      %s90 = sphi 0, %s90
      %s92 = sphi 0, %s90
      %s93 = sphi 0, %s92
      %s107 = sphi 0, %s93
      %s113 = sphi 0, %s115
      %s116 = sphi 0, %s113
      %s117 = sphi 0, %s116
      %s133 = sphi 0, %s117
    $region4: #{tpu_custom_call.1} parent=1 // loop_header_branch
      %19 = sbr.rel (%p17) target = $region8
    $region5: #{tpu_custom_call.1} parent=1 // loop_body
      %s21 = ssub.s32 %s16, 1
      %s22 = ssub.s32 %s16, 2
      %s29 = sadd.s32 1, %s24
      %p30 = scmp.ge.s32.totalorder %s29, 4
      %s31 = scalar_select %p30, 0, %s29
      %s32 = sadd.s32 1, %s23
      %s33 = scalar_select %p30, %s32, %s23
      %p34 = scmp.ge.s32.totalorder %s33, 1
      %s35 = scalar_select %p34, 0, %s33
      %s36 = ssub.s32 %s23, %s35
      %s37 = ssub.s32 %s24, %s31
      %s38 = sor.u32 %s36, %s37
      %p39 = scmp.eq.s32.totalorder %s38, 0
      %s41 = sadd.s32 %s40, 1
      %s42 = scalar_select %p39, %s40, %s41
      %p45 = pneg %p39
      %p46 = scmp.eq.s32.totalorder %s16, 3
      %p47 = por %p45, %p46
      %p48 = scmp.ne.s32.totalorder %s40, %s43
      %p49 = scmp.eq.s32.totalorder %s16, 0
      %p50 = por %p48, %p49
      %p51 = scmp.ne.s32.totalorder %s40, %s43
      %p52 = scmp.eq.s32.totalorder %s21, 3
      %p53 = por %p51, %p52
      %p54 = scmp.ne.s32.totalorder %s43, %s44
      %p55 = scmp.eq.s32.totalorder %s21, 0
      %p56 = por %p54, %p55
      %p57 = scmp.ne.s32.totalorder %s43, %s44
      %p58 = scmp.eq.s32.totalorder %s22, 3
      %p59 = por %p57, %p58
      %p61 = scmp.ne.s32.totalorder %s44, %s60
      %p62 = scmp.eq.s32.totalorder %s22, 0
      %p63 = por %p61, %p62
      %s64 = ssub.s32 %s24, %s31
      %p65 = scmp.eq.s32.totalorder %s64, 0
      %s67 = sadd.s32 %s66, 1
      %s68 = scalar_select %p65, %s66, %s67
      %p71 = pneg %p65
      %p72 = scmp.eq.s32.totalorder %s16, 3
      %p73 = por %p71, %p72
      %p74 = scmp.ne.s32.totalorder %s66, %s69
      %p75 = scmp.eq.s32.totalorder %s16, 0
      %p76 = por %p74, %p75
      %p77 = scmp.ne.s32.totalorder %s66, %s69
      %p78 = scmp.eq.s32.totalorder %s21, 3
      %p79 = por %p77, %p78
      %p80 = scmp.ne.s32.totalorder %s69, %s70
      %p81 = scmp.eq.s32.totalorder %s21, 0
      %p82 = por %p80, %p81
      %p83 = scmp.ne.s32.totalorder %s69, %s70
      %p84 = scmp.eq.s32.totalorder %s22, 3
      %p85 = por %p83, %p84
      %p87 = scmp.ne.s32.totalorder %s70, %s86
      %p88 = scmp.eq.s32.totalorder %s22, 0
      %p89 = por %p87, %p88
      %s91 = sadd.s32 %s90, 1
      %p94 = scmp.eq.s32.totalorder %s16, 3
      %p95 = scmp.ne.s32.totalorder %s90, %s92
      %p96 = scmp.eq.s32.totalorder %s16, 0
      %p97 = por %p95, %p96
      %p98 = scmp.ne.s32.totalorder %s90, %s92
      %p99 = scmp.eq.s32.totalorder %s21, 3
      %p100 = por %p98, %p99
      %p101 = scmp.ne.s32.totalorder %s92, %s93
      %p102 = scmp.eq.s32.totalorder %s21, 0
      %p103 = por %p101, %p102
      %p104 = scmp.ne.s32.totalorder %s92, %s93
      %p105 = scmp.eq.s32.totalorder %s22, 3
      %p106 = por %p104, %p105
      %p108 = scmp.ne.s32.totalorder %s93, %s107
      %p109 = scmp.eq.s32.totalorder %s22, 0
      %p110 = por %p108, %p109
      %s111 = ssub.s32 %s23, %s35
      %p112 = scmp.eq.s32.totalorder %s111, 0
      %s114 = sadd.s32 %s113, 1
      %s115 = scalar_select %p112, %s113, %s114
      %p118 = pneg %p112
      %p119 = scmp.eq.s32.totalorder %s16, 3
      %p120 = por %p118, %p119
      %p121 = scmp.ne.s32.totalorder %s113, %s116
      %p122 = scmp.eq.s32.totalorder %s16, 0
      %p123 = por %p121, %p122
      %p124 = scmp.ne.s32.totalorder %s113, %s116
      %p125 = scmp.eq.s32.totalorder %s21, 3
      %p126 = por %p124, %p125
      %p127 = scmp.ne.s32.totalorder %s116, %s117
      %p128 = scmp.eq.s32.totalorder %s21, 0
      %p129 = por %p127, %p128
      %p130 = scmp.ne.s32.totalorder %s116, %s117
      %p131 = scmp.eq.s32.totalorder %s22, 3
      %p132 = por %p130, %p131
      %p134 = scmp.ne.s32.totalorder %s117, %s133
      %p135 = scmp.eq.s32.totalorder %s22, 0
      %p136 = por %p134, %p135
      %p137 = scmp.le.s32.totalorder 1, %s16
      %p138 = scmp.lt.s32.totalorder %s16, 5
      %p139 = pnand %p137, %p138
      %p140 = pneg %p139
      // Predicated region
      $region9: #{tpu_custom_call.1} parent=5 // pred_check
        _
      $region10: #{tpu_custom_call.1} parent=5 // pred_check_branch
        %142 = sbr.rel (%p139) target = $region12
      $region11: #{tpu_custom_call.1} parent=5 // pred_region
        %s143 = ssub.s32 %s16, 1
        // Predicated region
        $region13: #{tpu_custom_call.1} parent=11 // pred_check
          %p144 = pneg %p103
        $region14: #{tpu_custom_call.1} parent=11 // pred_check_branch
          %146 = sbr.rel (%p144) target = $region16
        $region15: #{tpu_custom_call.1} parent=11 // pred_region
          _
        $region16: #{tpu_custom_call.1} parent=11 // pred_fallthru
          _
      $region12: #{tpu_custom_call.1} parent=5 // pred_fallthru
        _
      %p147 = scmp.lt.s32.totalorder %s16, 4
      // Predicated region
      $region17: #{tpu_custom_call.1} parent=5 // pred_check
        %p148 = pneg %p147
      $region18: #{tpu_custom_call.1} parent=5 // pred_check_branch
        %150 = sbr.rel (%p148) target = $region20
      $region19: #{tpu_custom_call.1} parent=5 // pred_region
        // Predicated region
        $region21: #{tpu_custom_call.1} parent=19 // pred_check
          %p151 = pneg %p50
        $region22: #{tpu_custom_call.1} parent=19 // pred_check_branch
          %153 = sbr.rel (%p151) target = $region24
        $region23: #{tpu_custom_call.1} parent=19 // pred_region
          %s154 = sand.u32 %s40, 1
          %s155 = scalar_lea.sflag [#allocation4], %s154
          %s156 = sand.u32 %s40, 1
          %s157 = smul.addr %s156, 8
          %s158 = scalar_lea.vmem [#allocation3], %s157
          %s160 = ssub.s32 128, 128
          %161 = vsyncadd %s155, %s160
          %s162 = smul.addr %s23, 4
          %s163 = sadd.s32 %s24, %s162
          %s164 = smul.addr %s163, 128
          %s165 = scalar_lea.hbm %s0, %s164
          %s167 = sshll.u32 %s158, 4
          %s168 = int_to_ptr.vmem [resolvable:$true] %s167
          %170 = dma.hbm_to_vmem [thread:$0]  %s165, 128, %s168, %s155
        $region24: #{tpu_custom_call.1} parent=19 // pred_fallthru
          _
        // Predicated region
        $region25: #{tpu_custom_call.1} parent=19 // pred_check
          %p171 = pneg %p76
        $region26: #{tpu_custom_call.1} parent=19 // pred_check_branch
          %173 = sbr.rel (%p171) target = $region28
        $region27: #{tpu_custom_call.1} parent=19 // pred_region
          %s174 = sand.u32 %s66, 1
          %s175 = scalar_lea.sflag [#allocation7], %s174
          %s176 = sand.u32 %s66, 1
          %s177 = smul.addr %s176, 128
          %s178 = scalar_lea.vmem [#allocation6], %s177
          %s179 = smul.u32 16, %s24
          %s181 = ssub.s32 2048, 2048
          %182 = vsyncadd %s175, %s181
          %s183 = smul.addr %s179, 128
          %s184 = scalar_lea.hbm %s1, %s183
          %s185 = sshll.u32 %s178, 4
          %s186 = int_to_ptr.vmem [resolvable:$true] %s185
          %191 = dma.hbm_to_vmem [thread:$0]  %s184, 2048, %s186, %s175, 128, 128, 8
        $region28: #{tpu_custom_call.1} parent=19 // pred_fallthru
          _
      $region20: #{tpu_custom_call.1} parent=5 // pred_fallthru
        _
      %p192 = scmp.le.s32.totalorder 1, %s16
      %p193 = scmp.lt.s32.totalorder %s16, 5
      %p194 = pnand %p192, %p193
      %p195 = pneg %p194
      // Predicated region
      $region29: #{tpu_custom_call.1} parent=5 // pred_check
        _
      $region30: #{tpu_custom_call.1} parent=5 // pred_check_branch
        %197 = sbr.rel (%p194) target = $region32
      $region31: #{tpu_custom_call.1} parent=5 // pred_region
        %s198 = ssub.s32 %s16, 1
        %s199 = sand.u32 %s43, 1
        %s200 = scalar_lea.sflag [#allocation4], %s199
        %s201 = sand.u32 %s43, 1
        %s202 = smul.addr %s201, 8
        %s203 = scalar_lea.vmem [#allocation3], %s202
        // Predicated region
        $region33: #{tpu_custom_call.1} parent=31 // pred_check
          %p204 = pneg %p56
        $region34: #{tpu_custom_call.1} parent=31 // pred_check_branch
          %206 = sbr.rel (%p204) target = $region36
        $region35: #{tpu_custom_call.1} parent=31 // pred_region
          %207 = dma.done %s200, 128
        $region36: #{tpu_custom_call.1} parent=31 // pred_fallthru
          _
        %s208 = sand.u32 %s69, 1
        %s209 = scalar_lea.sflag [#allocation7], %s208
        %s210 = sand.u32 %s69, 1
        %s211 = smul.addr %s210, 128
        %s212 = scalar_lea.vmem [#allocation6], %s211
        // Predicated region
        $region37: #{tpu_custom_call.1} parent=31 // pred_check
          %p213 = pneg %p82
        $region38: #{tpu_custom_call.1} parent=31 // pred_check_branch
          %215 = sbr.rel (%p213) target = $region40
        $region39: #{tpu_custom_call.1} parent=31 // pred_region
          %216 = dma.done %s209, 2048
        $region40: #{tpu_custom_call.1} parent=31 // pred_fallthru
          _
        %s217 = sand.u32 %s43, 1
        %s218 = scalar_lea.sflag [#allocation4], %s217
        %s219 = sand.u32 %s43, 1
        %s220 = smul.addr %s219, 8
        %s221 = scalar_lea.vmem [#allocation3], %s220
        %p222 = pneg %p56
        %p223 = pneg %p53
        %s224 = sand.u32 %s69, 1
        %s225 = scalar_lea.sflag [#allocation7], %s224
        %s226 = sand.u32 %s69, 1
        %s227 = smul.addr %s226, 128
        %s228 = scalar_lea.vmem [#allocation6], %s227
        %p229 = pneg %p82
        %p230 = pneg %p79
        %p231 = pneg %p103
        %p232 = pneg %p100
        %p233 = pneg %p129
        %p234 = pneg %p126
        %s235 = smul.u32 16, %s26
        %p236 = scmp.eq.s32.totalorder %s26, 0
        // Predicated region
        $region41: #{tpu_custom_call.1} parent=31 // pred_check
          %p237 = pneg %p236
        $region42: #{tpu_custom_call.1} parent=31 // pred_check_branch
          %239 = sbr.rel (%p237) target = $region44
        $region43: #{tpu_custom_call.1} parent=31 // pred_region
          %240 = vst [vmem:[#allocation2] sm:$0xff] 0.0
        $region44: #{tpu_custom_call.1} parent=31 // pred_fallthru
          _
        %v241 = vld [vmem:[#allocation2] sm:$0xff]
        %v242 = vld [vmem:[%s203] sm:$0xff]
        %v243 = vld [vmem:[%s212] sm:$0xff]
        %v244 = vld [vmem:[%s212 + $0x8] sm:$0xff]
        %v245 = vld [vmem:[%s212 + $0x10] sm:$0xff]
        %v246 = vld [vmem:[%s212 + $0x18] sm:$0xff]
        %v247 = vld [vmem:[%s212 + $0x20] sm:$0xff]
        %v248 = vld [vmem:[%s212 + $0x28] sm:$0xff]
        %v249 = vld [vmem:[%s212 + $0x30] sm:$0xff]
        %v250 = vld [vmem:[%s212 + $0x38] sm:$0xff]
        %v251 = vld [vmem:[%s212 + $0x40] sm:$0xff]
        %v252 = vld [vmem:[%s212 + $0x48] sm:$0xff]
        %v253 = vld [vmem:[%s212 + $0x50] sm:$0xff]
        %v254 = vld [vmem:[%s212 + $0x58] sm:$0xff]
        %v255 = vld [vmem:[%s212 + $0x60] sm:$0xff]
        %v256 = vld [vmem:[%s212 + $0x68] sm:$0xff]
        %v257 = vld [vmem:[%s212 + $0x70] sm:$0xff]
        %v258 = vld [vmem:[%s212 + $0x78] sm:$0xff]
        %259 = vmatprep.subr.mxu0 0.0
        %260 = vmatpush1.msra.mxu0 %v243
        %261 = vmatprep.subr.mxu0 0.0
        %262 = vmatpush1.msra.mxu0 %v244
        %263 = vmatprep.subr.mxu0 0.0
        %264 = vmatpush1.msra.mxu0 %v245
        %265 = vmatprep.subr.mxu0 0.0
        %266 = vmatpush1.msra.mxu0 %v246
        %267 = vmatprep.subr.mxu0 0.0
        %268 = vmatpush1.msra.mxu0 %v247
        %269 = vmatprep.subr.mxu0 0.0
        %270 = vmatpush1.msra.mxu0 %v248
        %271 = vmatprep.subr.mxu0 0.0
        %272 = vmatpush1.msra.mxu0 %v249
        %273 = vmatprep.subr.mxu0 0.0
        %274 = vmatpush1.msra.mxu0 %v250
        %275 = vmatprep.subr.mxu0 0.0
        %276 = vmatpush1.msra.mxu0 %v251
        %277 = vmatprep.subr.mxu0 0.0
        %278 = vmatpush1.msra.mxu0 %v252
        %279 = vmatprep.subr.mxu0 0.0
        %280 = vmatpush1.msra.mxu0 %v253
        %281 = vmatprep.subr.mxu0 0.0
        %282 = vmatpush1.msra.mxu0 %v254
        %283 = vmatprep.subr.mxu0 0.0
        %284 = vmatpush1.msra.mxu0 %v255
        %285 = vmatprep.subr.mxu0 0.0
        %286 = vmatpush1.msra.mxu0 %v256
        %287 = vmatprep.subr.mxu0 0.0
        %288 = vmatpush1.msra.mxu0 %v257
        %289 = vmatprep.subr.mxu0 0.0
        %290 = vmatpush1.msra.mxu0 %v258
        %291 = vmatprep.subr.mxu0 0.0
        %292 = vmatpush1.msra.mxu0 0.0
        %293 = vmatprep.subr.mxu0 0.0
        %294 = vmatpush1.msra.mxu0 0.0
        %295 = vmatprep.subr.mxu0 0.0
        %296 = vmatpush1.msra.mxu0 0.0
        %297 = vmatprep.subr.mxu0 0.0
        %298 = vmatpush1.msra.mxu0 0.0
        %299 = vmatprep.subr.mxu0 0.0
        %300 = vmatpush1.msra.mxu0 0.0
        %301 = vmatprep.subr.mxu0 0.0
        %302 = vmatpush1.msra.mxu0 0.0
        %303 = vmatprep.subr.mxu0 0.0
        %304 = vmatpush1.msra.mxu0 0.0
        %305 = vmatprep.subr.mxu0 0.0
        %306 = vmatpush1.msra.mxu0 0.0
        %307 = vmatprep.subr.mxu0 0.0
        %308 = vmatpush1.msra.mxu0 0.0
        %309 = vmatprep.subr.mxu0 0.0
        %310 = vmatpush1.msra.mxu0 0.0
        %311 = vmatprep.subr.mxu0 0.0
        %312 = vmatpush1.msra.mxu0 0.0
        %313 = vmatprep.subr.mxu0 0.0
        %314 = vmatpush1.msra.mxu0 0.0
        %315 = vmatprep.subr.mxu0 0.0
        %316 = vmatpush1.msra.mxu0 0.0
        %317 = vmatprep.subr.mxu0 0.0
        %318 = vmatpush1.msra.mxu0 0.0
        %319 = vmatprep.subr.mxu0 0.0
        %320 = vmatpush1.msra.mxu0 0.0
        %321 = vmatprep.subr.mxu0 0.0
        %322 = vmatpush1.msra.mxu0 0.0
        %323 = vmatprep.mubr.f32.mxu0 0.0
        %324 = vmatmul.mubr.f32.gmra.mrb[0].mxu0 %v242
        %v325 = vpop.f32.mrb[0].mxu0
        %v326 = vadd.f32 0.0, %v325
        %v327 = vpop.f32.mrb[0].mxu0
        %328 = vdwg.mxu0
        %v329 = vadd.f32 %v241, %v326
        %330 = vst [vmem:[#allocation2] sm:$0xff] %v329
        %p331 = scmp.eq.s32.totalorder %s26, 3
        // Predicated region
        $region45: #{tpu_custom_call.1} parent=31 // pred_check
          %p332 = pneg %p331
        $region46: #{tpu_custom_call.1} parent=31 // pred_check_branch
          %334 = sbr.rel (%p332) target = $region48
        $region47: #{tpu_custom_call.1} parent=31 // pred_region
          %v335 = vld [vmem:[#allocation2] sm:$0xff]
          %v336 = vld [vmem:[%s2] sm:$0x1]
          %v338 = vlaneseq
          %v339 = vshrl.u32 %v338, 7
          %v340 = vsub.s32 0, %v339
          %v341 = vrot.slane %v336, %v340
          %v343 = vadd.f32 %v335, %v341
          %v344 = vmax.f32 %v343, 0.0
          %345 = vst [vmem:[#allocation8] sm:$0xff] %v344
        $region48: #{tpu_custom_call.1} parent=31 // pred_fallthru
          _
        // Predicated region
        $region49: #{tpu_custom_call.1} parent=31 // pred_check
          %p346 = pneg %p126
        $region50: #{tpu_custom_call.1} parent=31 // pred_check_branch
          %348 = sbr.rel (%p346) target = $region52
        $region51: #{tpu_custom_call.1} parent=31 // pred_region
          %s350 = ssub.s32 128, 128
          %351 = vsyncadd [#allocation5], %s350
          %s352 = smul.addr %s25, 128
          %s353 = scalar_lea.hbm %s3, %s352
          %s355 = sshll.u32 [#allocation8], 4
          %s356 = int_to_ptr.vmem [resolvable:$true] %s355
          %358 = dma.vmem_to_hbm [thread:$0]  %s356, 128, %s353, [#allocation5]
        $region52: #{tpu_custom_call.1} parent=31 // pred_fallthru
          _
        // Predicated region
        $region53: #{tpu_custom_call.1} parent=31 // pred_check
          %p359 = pneg %p126
        $region54: #{tpu_custom_call.1} parent=31 // pred_check_branch
          %361 = sbr.rel (%p359) target = $region56
        $region55: #{tpu_custom_call.1} parent=31 // pred_region
          %362 = dma.done [#allocation5], 128
        $region56: #{tpu_custom_call.1} parent=31 // pred_fallthru
          _
      $region32: #{tpu_custom_call.1} parent=5 // pred_fallthru
        _
      %p363 = scmp.le.s32.totalorder 2, %s16
      // Predicated region
      $region57: #{tpu_custom_call.1} parent=5 // pred_check
        %p364 = pneg %p363
      $region58: #{tpu_custom_call.1} parent=5 // pred_check_branch
        %366 = sbr.rel (%p364) target = $region60
      $region59: #{tpu_custom_call.1} parent=5 // pred_region
        %s367 = ssub.s32 %s16, 2
      $region60: #{tpu_custom_call.1} parent=5 // pred_fallthru
        _
    $region6: #{tpu_custom_call.1} parent=1 // loop_footer
      %s20 = sadd.s32 1, %s16
    $region7: #{tpu_custom_call.1} parent=1 // loop_footer_branch
      %15 = sbr.rel target = $region3
    $region8: #{tpu_custom_call.1} parent=1 // loop_exit
      _
    %368 = vsyncpa [#allocation4], 1
    %s369 = scalar_lea.sflag [#allocation4], 1
    %370 = vsyncpa %s369, 1
    %371 = vsyncpa [#allocation7], 1
    %s372 = scalar_lea.sflag [#allocation7], 1
    %373 = vsyncpa %s372, 1
    %374 = vsyncpa [#allocation5], 1
    %s375 = scalar_lea.sflag [#allocation5], 1
    %376 = vsyncpa %s375, 1

</llo_original>
